<compile_context>
chip_gen: v6e
topology: v6e:2x2x1
jax: 0.10.0
libtpu: 0.0.40
codegen_flags: <defaults>
</compile_context>

<pallas_src>
import functools

import jax
import jax.numpy as jnp
from jax.experimental import pallas as pl
from jax.experimental.pallas import tpu as pltpu


# ----------------------------- Pallas kernel --------------------------------
def _quadratic_layer_kernel(x_ref, wq_ref, wlp_ref, wlin_ref, b_ref, o_ref):
    # x_ref   : (tmp, in_dim*pack)            packed rows, lane-dense
    # wq_ref  : (in_dim*pack, nqp*pack)       block-diagonal  kron(I, W_quad^T)
    # wlp_ref : (nqp*pack, out_dim*pack)      block-diagonal  kron(I, W_qlp^T)
    # wlin_ref: (in_dim*pack, out_dim*pack)   block-diagonal  kron(I, W_lin^T)
    # b_ref   : (1, out_dim*pack) f32         bias tiled `pack` times
    x = x_ref[...]

    # Quadratic path: MXU matmuls accumulate in f32; square stays in f32
    # (v5e VPU has no bf16 arithmetic).
    y = jnp.dot(x, wq_ref[...], preferred_element_type=jnp.float32)
    sq = y * y
    quad = jnp.dot(sq.astype(wlp_ref.dtype), wlp_ref[...],
                   preferred_element_type=jnp.float32)

    # Linear path (with bias).
    lin = jnp.dot(x, wlin_ref[...], preferred_element_type=jnp.float32)

    o_ref[...] = (quad + lin + b_ref[...]).astype(o_ref.dtype)


# ------------------------------- helpers -------------------------------------
def _round_up(x, m):
    return ((x + m - 1) // m) * m


def _choose_pack(in_dim, nqp, out_dim, max_packed_dim=4096):
    """Lane-packing factor: make the packed output lane-dense (out_dim*pack ->
    128 lanes when possible) while keeping the block-diagonal weights small
    enough to sit resident in VMEM."""
    if out_dim >= 128:
        return 1
    pack = max(1, 128 // out_dim)
    while pack > 1 and pack * max(in_dim, nqp, out_dim) > max_packed_dim:
        pack //= 2
    return pack


def _choose_row_tile(rows_p, requested_rows, pack):
    """Packed-row tile: big enough to amortize the ~0.35us/step overhead, small
    enough that the grid has >= 4 steps (DMA/compute pipelining + megacore
    sharding of the 'parallel' axis on v7x)."""
    if requested_rows is None:
        requested_rows = 4096                       # in original-row units
    req_p = max(8, _round_up(max(requested_rows // pack, 1), 8))
    cap_p = max(8, _round_up(pl.cdiv(rows_p, 4), 8))
    return min(req_p, cap_p)


# ------------------------------- wrapper -------------------------------------
@functools.partial(jax.jit, static_argnames=("out_dim", "pack", "tm"))
def quadratic_layer_forward(x, wq_bd, wlp_bd, wlin_bd, b_tiled, *,
                            out_dim, pack, tm=None):
    """Fused QuadraticLayer forward (prep_stage=True).

    x       : (..., in_dim)                    any float dtype (bf16 recommended)
    wq_bd   : (in_dim*pack, nqp*pack)          block-diag, pre-transposed W_quad
    wlp_bd  : (nqp*pack, out_dim*pack)         block-diag, pre-transposed W_qlp
    wlin_bd : (in_dim*pack, out_dim*pack)      block-diag, pre-transposed W_lin
    b_tiled : (1, out_dim*pack) f32            bias tiled `pack` times
    out_dim, pack : static ints from prepare_params
    tm      : optional row-tile request (in original rows), static
    """
    in_dim = x.shape[-1]
    lead = x.shape[:-1]
    out_dtype = x.dtype
    ow = out_dim * pack
    assert wq_bd.shape[0] == in_dim * pack
    assert wlp_bd.shape[1] == ow and wlin_bd.shape == (in_dim * pack, ow)
    assert b_tiled.shape == (1, ow)

    x2d = x.reshape(-1, in_dim)
    n = x2d.shape[0]

    rows_p = pl.cdiv(n, pack)                      # packed rows needed
    tmp = _choose_row_tile(rows_p, tm, pack)       # packed rows per grid step
    rows_p_pad = _round_up(rows_p, tmp)
    n_pad = rows_p_pad * pack
    if n_pad != n:                                 # ragged N: zero-pad rows
        x2d = jnp.pad(x2d, ((0, n_pad - n), (0, 0)))
    # Bit-identical row-major reshape: pack `pack` rows into the lane dim.
    xp = x2d.reshape(rows_p_pad, in_dim * pack)
    grid = (rows_p_pad // tmp,)

    # Explicit VMEM budget: double-buffered x/out blocks + (double-buffered)
    # block-diagonal weights.  Must stay well under the 32 MiB scoped default
    # (v7x physical VMEM is only 64 MiB).
    vmem_est = (2 * tmp * in_dim * pack * xp.dtype.itemsize
                + 2 * tmp * ow * jnp.dtype(out_dtype).itemsize
                + 2 * sum(int(a.size) * a.dtype.itemsize
                          for a in (wq_bd, wlp_bd, wlin_bd, b_tiled)))
    assert vmem_est < 24 * 1024 * 1024, "row tile too large for VMEM budget"

    outp = pl.pallas_call(
        _quadratic_layer_kernel,
        out_shape=jax.ShapeDtypeStruct((rows_p_pad, ow), out_dtype),
        grid_spec=pltpu.PrefetchScalarGridSpec(
            num_scalar_prefetch=0,
            grid=grid,
            in_specs=[
                pl.BlockSpec((tmp, in_dim * pack), lambda i: (i, 0)),
                # Weights/bias are constant across the grid and small; default
                # double-buffering overhead is negligible here.
                pl.BlockSpec(wq_bd.shape, lambda i: (0, 0)),
                pl.BlockSpec(wlp_bd.shape, lambda i: (0, 0)),
                pl.BlockSpec(wlin_bd.shape, lambda i: (0, 0)),
                pl.BlockSpec((1, ow), lambda i: (0, 0)),
            ],
            # out_dim*pack = 128 lanes -> dense (unmasked) vector stores.
            out_specs=pl.BlockSpec((tmp, ow), lambda i: (i, 0)),
        ),
        compiler_params=pltpu.CompilerParams(
            dimension_semantics=("parallel",),      # megacore-shardable on v7x
            vmem_limit_bytes=32 * 1024 * 1024,
        ),
    )(xp, wq_bd, wlp_bd, wlin_bd, b_tiled)

    # Bit-identical unpack + drop padded rows.
    out2d = outp.reshape(n_pad, out_dim)[:n]
    return out2d.reshape(*lead, out_dim)


# --------------------------- parameter construction -------------------------
def gram_schmidt(v):
    """Row-wise Gram-Schmidt orthonormalization (matches module init intent)."""
    rows = []
    for i in range(v.shape[0]):
        vec = v[i, :]
        for prev in rows:
            vec = vec - jnp.dot(prev, vec) * prev
        vec = vec / jnp.linalg.norm(vec)
        rows.append(vec)
    return jnp.stack(rows, axis=0)


def init_params(key, in_dim, num_quad_prep, out_dim):
    k1, k2, k3, k4 = jax.random.split(key, 4)
    # quadratic: nn.Linear(in_dim, num_quad_prep, bias=False), Gram-Schmidt rows.
    w_quad = gram_schmidt(
        jax.random.normal(k1, (num_quad_prep, in_dim), jnp.float32) * 0.1)
    # quad_linear_prep: (out_dim, num_quad_prep).
    bound = (6.0 / (num_quad_prep + out_dim)) ** 0.5
    w_qlp = jax.random.uniform(k2, (out_dim, num_quad_prep), jnp.float32,
                               minval=-bound, maxval=bound)
    # linear: nn.Linear(in_dim, out_dim) weight + bias.
    lim = 1.0 / (in_dim ** 0.5)
    w_lin = jax.random.uniform(k3, (out_dim, in_dim), jnp.float32,
                               minval=-lim, maxval=lim)
    b_lin = jax.random.uniform(k4, (out_dim,), jnp.float32,
                               minval=-lim, maxval=lim)
    return w_quad, w_qlp, w_lin, b_lin


def prepare_params(w_quad, w_quad_linear_prep, w_linear, b_linear,
                   compute_dtype=jnp.bfloat16):
    """Done ONCE outside the per-call hot path: pre-transpose, lane-pack into
    block-diagonal form (kron(I_pack, W^T)) and cast to the compute dtype
    (bf16 halves HBM weight traffic); bias stays f32."""
    w_quad = jnp.asarray(w_quad, jnp.float32)
    w_qlp = jnp.asarray(w_quad_linear_prep, jnp.float32)
    w_lin = jnp.asarray(w_linear, jnp.float32)
    b = jnp.asarray(b_linear, jnp.float32).reshape(-1)
    out_dim, nqp = w_qlp.shape
    in_dim = w_quad.shape[1]
    pack = _choose_pack(in_dim, nqp, out_dim)
    eye = jnp.eye(pack, dtype=jnp.float32)

    def bd(w_t):  # (K, N) -> block-diagonal (pack*K, pack*N)
        return jnp.kron(eye, w_t).astype(compute_dtype)

    return dict(
        wq_bd=bd(w_quad.T),                     # (in_dim*pack, nqp*pack)
        wlp_bd=bd(w_qlp.T),                     # (nqp*pack, out_dim*pack)
        wlin_bd=bd(w_lin.T),                    # (in_dim*pack, out_dim*pack)
        b_tiled=jnp.tile(b.reshape(1, out_dim), (1, pack)),  # f32
        out_dim=int(out_dim),
        pack=int(pack),
    )


def reference_forward(x, w_quad, w_qlp, w_lin, b_lin, compute_dtype):
    """Pure-JAX reference (f32 math, highest matmul precision); inputs/weights
    are first rounded to the compute dtype to mirror what the kernel sees."""
    mm = functools.partial(jnp.matmul, precision=jax.lax.Precision.HIGHEST)
    f32 = jnp.float32
    xf = jnp.asarray(x).astype(compute_dtype).astype(f32)
    wq = jnp.asarray(w_quad, f32).astype(compute_dtype).astype(f32)
    wp = jnp.asarray(w_qlp, f32).astype(compute_dtype).astype(f32)
    wl = jnp.asarray(w_lin, f32).astype(compute_dtype).astype(f32)
    quad = mm(jnp.square(mm(xf, wq.T)), wp.T)
    lin = mm(xf, wl.T) + jnp.asarray(b_lin, f32)
    return quad + lin


# ------------------------------------ main -----------------------------------
if __name__ == "__main__":
    # num_quad (post-prep count) is unused by the prep-stage forward.
    in_dim, num_quad_prep, num_quad, out_dim = 32, 16, 4, 8

    key = jax.random.PRNGKey(0)
    kx, kp = jax.random.split(key)
    w_quad, w_qlp, w_lin, b_lin = init_params(kp, in_dim, num_quad_prep, out_dim)

    # --- main (perf-path) check: bf16 inputs, multi-step pipelined grid ------
    batch, seq = 4, 1024                        # N = 4096 rows -> 4 grid steps
    x = jax.random.normal(kx, (batch, seq, in_dim), jnp.float32)
    x_bf16 = x.astype(jnp.bfloat16)             # bf16 x halves HBM read traffic
    params_bf16 = prepare_params(w_quad, w_qlp, w_lin, b_lin, jnp.bfloat16)
    out_bf16 = jax.block_until_ready(quadratic_layer_forward(x_bf16, **params_bf16))
    assert out_bf16.shape == (batch, seq, out_dim)
    ref_bf16 = reference_forward(x, w_quad, w_qlp, w_lin, b_lin, jnp.bfloat16)
    # bf16 inputs / bf16 output -> loosened tolerance.
    assert jnp.allclose(out_bf16.astype(jnp.float32), ref_bf16, atol=1e-1, rtol=1e-1)

    # --- f32 path with a ragged row count (exercises wrapper padding) --------
    x_small = jax.random.normal(jax.random.PRNGKey(1), (2, 7, in_dim), jnp.float32)
    params_f32 = prepare_params(w_quad, w_qlp, w_lin, b_lin, jnp.float32)
    out_f32 = jax.block_until_ready(quadratic_layer_forward(x_small, **params_f32))
    ref_f32 = reference_forward(x_small, w_quad, w_qlp, w_lin, b_lin, jnp.float32)
    assert out_f32.shape == (2, 7, out_dim)
    assert jnp.allclose(out_f32, ref_f32, atol=1e-4, rtol=1e-4)

    # TODO(synk): the prep_stage=False path (calc_quads + quad_linear) and the
    # replace_previous / orthonormalize / reorder weight-surgery + sympy export
    # are host-side model editing, not part of this forward kernel.
    print("KERNEL_OK")
</pallas_src>

<mosaic_0001>
module attributes {stable_mosaic.version = 11 : i64} {
  func.func @_quadratic_layer_kernel(%arg0: i32, %arg1: memref<64x512xbf16, #tpu.memory_space<vmem>>, %arg2: memref<512x256xbf16, #tpu.memory_space<vmem>>, %arg3: memref<256x128xbf16, #tpu.memory_space<vmem>>, %arg4: memref<512x128xbf16, #tpu.memory_space<vmem>>, %arg5: memref<1x128xf32, #tpu.memory_space<vmem>>, %arg6: memref<64x128xbf16, #tpu.memory_space<vmem>>) attributes {dimension_semantics = [#tpu.dimension_semantics<parallel>], iteration_bounds = array<i64: 4>, scalar_prefetch = 0 : i64, scratch_operands = 0 : i64, tpu.core_type = #tpu.core_type<tc>, window_params = [{transform_indices = @transform_0, window_bounds = array<i64: 64, 512>}, {pipeline_mode = #tpu.pipeline_mode<synchronous>, transform_indices = @transform_1, window_bounds = array<i64: 512, 256>}, {pipeline_mode = #tpu.pipeline_mode<synchronous>, transform_indices = @transform_2, window_bounds = array<i64: 256, 128>}, {pipeline_mode = #tpu.pipeline_mode<synchronous>, transform_indices = @transform_3, window_bounds = array<i64: 512, 128>}, {pipeline_mode = #tpu.pipeline_mode<synchronous>, transform_indices = @transform_4, window_bounds = array<i64: 1, 128>}, {transform_indices = @transform_5, window_bounds = array<i64: 64, 128>}]} {
    %c0 = arith.constant 0 : index
    %c0_0 = arith.constant 0 : index
    %0 = vector.load %arg1[%c0, %c0_0] : memref<64x512xbf16, #tpu.memory_space<vmem>>, vector<64x512xbf16>
    %c0_1 = arith.constant 0 : index
    %c0_2 = arith.constant 0 : index
    %1 = vector.load %arg2[%c0_1, %c0_2] : memref<512x256xbf16, #tpu.memory_space<vmem>>, vector<512x256xbf16>
    %cst = arith.constant dense<0.000000e+00> : vector<64x256xf32>
    %2 = tpu.matmul %0, %1, %cst {dimension_numbers = #tpu.dot_dimension_numbers<[1], [0], [0], [1], [0, 0, 1, 1], [], []>} : vector<64x512xbf16>, vector<512x256xbf16>, vector<64x256xf32> -> vector<64x256xf32>
    %3 = arith.mulf %2, %2 : vector<64x256xf32>
    %4 = arith.truncf %3 : vector<64x256xf32> to vector<64x256xbf16>
    %c0_3 = arith.constant 0 : index
    %c0_4 = arith.constant 0 : index
    %5 = vector.load %arg3[%c0_3, %c0_4] : memref<256x128xbf16, #tpu.memory_space<vmem>>, vector<256x128xbf16>
    %cst_5 = arith.constant dense<0.000000e+00> : vector<64x128xf32>
    %6 = tpu.matmul %4, %5, %cst_5 {dimension_numbers = #tpu.dot_dimension_numbers<[1], [0], [0], [1], [0, 0, 1, 1], [], []>} : vector<64x256xbf16>, vector<256x128xbf16>, vector<64x128xf32> -> vector<64x128xf32>
    %c0_6 = arith.constant 0 : index
    %c0_7 = arith.constant 0 : index
    %7 = vector.load %arg4[%c0_6, %c0_7] : memref<512x128xbf16, #tpu.memory_space<vmem>>, vector<512x128xbf16>
    %cst_8 = arith.constant dense<0.000000e+00> : vector<64x128xf32>
    %8 = tpu.matmul %0, %7, %cst_8 {dimension_numbers = #tpu.dot_dimension_numbers<[1], [0], [0], [1], [0, 0, 1, 1], [], []>} : vector<64x512xbf16>, vector<512x128xbf16>, vector<64x128xf32> -> vector<64x128xf32>
    %9 = arith.addf %6, %8 : vector<64x128xf32>
    %c0_9 = arith.constant 0 : index
    %c0_10 = arith.constant 0 : index
    %10 = vector.load %arg5[%c0_9, %c0_10] : memref<1x128xf32, #tpu.memory_space<vmem>>, vector<1x128xf32>
    %11 = vector.broadcast %10 : vector<1x128xf32> to vector<64x128xf32>
    %12 = arith.addf %9, %11 : vector<64x128xf32>
    %13 = arith.truncf %12 : vector<64x128xf32> to vector<64x128xbf16>
    %c0_11 = arith.constant 0 : index
    %c0_12 = arith.constant 0 : index
    %14 = vector.load %arg6[%c0_11, %c0_12] : memref<64x128xbf16, #tpu.memory_space<vmem>>, vector<64x128xbf16>
    tpu.vector_store %arg6[%c0_11, %c0_12], %13 {strides = array<i32>} : memref<64x128xbf16, #tpu.memory_space<vmem>>, vector<64x128xbf16>,
    return
  }
  func.func @transform_0(%arg0: i32) -> (i32, i32) {
    %c0_i32 = arith.constant 0 : i32
    %c0_i32_0 = arith.constant 0 : i32
    return %arg0, %c0_i32 : i32, i32
  }
  func.func @transform_1(%arg0: i32) -> (i32, i32) {
    %c0_i32 = arith.constant 0 : i32
    %c0_i32_0 = arith.constant 0 : i32
    %c0_i32_1 = arith.constant 0 : i32
    return %c0_i32, %c0_i32_0 : i32, i32
  }
  func.func @transform_2(%arg0: i32) -> (i32, i32) {
    %c0_i32 = arith.constant 0 : i32
    %c0_i32_0 = arith.constant 0 : i32
    %c0_i32_1 = arith.constant 0 : i32
    return %c0_i32, %c0_i32_0 : i32, i32
  }
  func.func @transform_3(%arg0: i32) -> (i32, i32) {
    %c0_i32 = arith.constant 0 : i32
    %c0_i32_0 = arith.constant 0 : i32
    %c0_i32_1 = arith.constant 0 : i32
    return %c0_i32, %c0_i32_0 : i32, i32
  }
  func.func @transform_4(%arg0: i32) -> (i32, i32) {
    %c0_i32 = arith.constant 0 : i32
    %c0_i32_0 = arith.constant 0 : i32
    %c0_i32_1 = arith.constant 0 : i32
    return %c0_i32, %c0_i32_0 : i32, i32
  }
  func.func @transform_5(%arg0: i32) -> (i32, i32) {
    %c0_i32 = arith.constant 0 : i32
    %c0_i32_0 = arith.constant 0 : i32
    return %arg0, %c0_i32 : i32, i32
  }
}

</mosaic_0001>

<llo_original>
// kernel: quadratic_layer_forward.1
$region0: #{quadratic_layer_forward.1}
  #allocation0 [shape = 'u32[]', space=smem, size = 0x4, offset = 0x4, fixed_abs, tag = 'smem constant byte address 0x4 - core index']
  #allocation1 [shape = 'u32[144,128]{1,0:T(1,128)}', space=vmem, size = 0x12000, scoped, tag = 'internal scratch']
  %s0 = inlined_call_operand.vmem [shape: bf16[256,512], index: 0, kind: input, shape index: {}]
  %s1 = inlined_call_operand.vmem [shape: bf16[512,256], index: 1, kind: input, shape index: {}]
  %s2 = inlined_call_operand.vmem [shape: bf16[256,128], index: 2, kind: input, shape index: {}]
  %s3 = inlined_call_operand.vmem [shape: bf16[512,128], index: 3, kind: input, shape index: {}]
  %s4 = inlined_call_operand.vmem [shape: f32[1,128], index: 4, kind: input, shape index: {}]
  %s5 = inlined_call_operand.vmem [shape: bf16[256,128], index: 5, kind: output, shape index: {}]
  %s6 = sld [smem:[#allocation0]]
  $region53: #{quadratic_layer_forward.1} parent=0
    _
  %s8 = ssub.s32 1, %s6
  %s9 = scalar_select 0, %s8, %s6
  loop: start=0, step=1, limit=6
  $region2: #{quadratic_layer_forward.1} parent=0 // loop_pre_header
    _
  $region3: #{quadratic_layer_forward.1} parent=0 // loop_header
    %s11 = sphi 0, %s15
    %p12 = scmp.ge.s32.totalorder %s11, 6
    %s21 = sphi 0, %s23
    %s24 = sphi 0, %s21
    %s25 = sphi 0, %s24
    %s41 = sphi 0, %s25
    %s45 = sphi 0, %s45
    %s47 = sphi 0, %s45
    %s48 = sphi 0, %s47
    %s62 = sphi 0, %s48
    %s66 = sphi 0, %s66
    %s68 = sphi 0, %s66
    %s69 = sphi 0, %s68
    %s83 = sphi 0, %s69
    %s87 = sphi 0, %s87
    %s89 = sphi 0, %s87
    %s90 = sphi 0, %s89
    %s104 = sphi 0, %s90
    %s108 = sphi 0, %s108
    %s110 = sphi 0, %s108
    %s111 = sphi 0, %s110
    %s125 = sphi 0, %s111
    %s131 = sphi 0, %s133
    %s134 = sphi 0, %s131
    %s135 = sphi 0, %s134
    %s151 = sphi 0, %s135
  $region4: #{quadratic_layer_forward.1} parent=0 // loop_header_branch
    %14 = sbr.rel (%p12) target = $region8
  $region5: #{quadratic_layer_forward.1} parent=0 // loop_body
    %s16 = ssub.s32 %s11, 1
    %s17 = ssub.s32 %s11, 2
    %s18 = sadd.s32 %s11, 1
    %s19 = ssub.s32 %s11, %s18
    %p20 = scmp.eq.s32.totalorder %s19, 0
    %s22 = sadd.s32 %s21, 1
    %s23 = scalar_select %p20, %s21, %s22
    %p26 = pneg %p20
    %p27 = scmp.eq.s32.totalorder %s11, 3
    %p28 = por %p26, %p27
    %p29 = scmp.ne.s32.totalorder %s21, %s24
    %p30 = scmp.eq.s32.totalorder %s11, 0
    %p31 = por %p29, %p30
    %p32 = scmp.ne.s32.totalorder %s21, %s24
    %p33 = scmp.eq.s32.totalorder %s16, 3
    %p34 = por %p32, %p33
    %p35 = scmp.ne.s32.totalorder %s24, %s25
    %p36 = scmp.eq.s32.totalorder %s16, 0
    %p37 = por %p35, %p36
    %p38 = scmp.ne.s32.totalorder %s24, %s25
    %p39 = scmp.eq.s32.totalorder %s17, 3
    %p40 = por %p38, %p39
    %p42 = scmp.ne.s32.totalorder %s25, %s41
    %p43 = scmp.eq.s32.totalorder %s17, 0
    %p44 = por %p42, %p43
    %s46 = sadd.s32 %s45, 1
    %p49 = scmp.eq.s32.totalorder %s11, 3
    %p50 = scmp.ne.s32.totalorder %s45, %s47
    %p51 = scmp.eq.s32.totalorder %s11, 0
    %p52 = por %p50, %p51
    %p53 = scmp.ne.s32.totalorder %s45, %s47
    %p54 = scmp.eq.s32.totalorder %s16, 3
    %p55 = por %p53, %p54
    %p56 = scmp.ne.s32.totalorder %s47, %s48
    %p57 = scmp.eq.s32.totalorder %s16, 0
    %p58 = por %p56, %p57
    %p59 = scmp.ne.s32.totalorder %s47, %s48
    %p60 = scmp.eq.s32.totalorder %s17, 3
    %p61 = por %p59, %p60
    %p63 = scmp.ne.s32.totalorder %s48, %s62
    %p64 = scmp.eq.s32.totalorder %s17, 0
    %p65 = por %p63, %p64
    %s67 = sadd.s32 %s66, 1
    %p70 = scmp.eq.s32.totalorder %s11, 3
    %p71 = scmp.ne.s32.totalorder %s66, %s68
    %p72 = scmp.eq.s32.totalorder %s11, 0
    %p73 = por %p71, %p72
    %p74 = scmp.ne.s32.totalorder %s66, %s68
    %p75 = scmp.eq.s32.totalorder %s16, 3
    %p76 = por %p74, %p75
    %p77 = scmp.ne.s32.totalorder %s68, %s69
    %p78 = scmp.eq.s32.totalorder %s16, 0
    %p79 = por %p77, %p78
    %p80 = scmp.ne.s32.totalorder %s68, %s69
    %p81 = scmp.eq.s32.totalorder %s17, 3
    %p82 = por %p80, %p81
    %p84 = scmp.ne.s32.totalorder %s69, %s83
    %p85 = scmp.eq.s32.totalorder %s17, 0
    %p86 = por %p84, %p85
    %s88 = sadd.s32 %s87, 1
    %p91 = scmp.eq.s32.totalorder %s11, 3
    %p92 = scmp.ne.s32.totalorder %s87, %s89
    %p93 = scmp.eq.s32.totalorder %s11, 0
    %p94 = por %p92, %p93
    %p95 = scmp.ne.s32.totalorder %s87, %s89
    %p96 = scmp.eq.s32.totalorder %s16, 3
    %p97 = por %p95, %p96
    %p98 = scmp.ne.s32.totalorder %s89, %s90
    %p99 = scmp.eq.s32.totalorder %s16, 0
    %p100 = por %p98, %p99
    %p101 = scmp.ne.s32.totalorder %s89, %s90
    %p102 = scmp.eq.s32.totalorder %s17, 3
    %p103 = por %p101, %p102
    %p105 = scmp.ne.s32.totalorder %s90, %s104
    %p106 = scmp.eq.s32.totalorder %s17, 0
    %p107 = por %p105, %p106
    %s109 = sadd.s32 %s108, 1
    %p112 = scmp.eq.s32.totalorder %s11, 3
    %p113 = scmp.ne.s32.totalorder %s108, %s110
    %p114 = scmp.eq.s32.totalorder %s11, 0
    %p115 = por %p113, %p114
    %p116 = scmp.ne.s32.totalorder %s108, %s110
    %p117 = scmp.eq.s32.totalorder %s16, 3
    %p118 = por %p116, %p117
    %p119 = scmp.ne.s32.totalorder %s110, %s111
    %p120 = scmp.eq.s32.totalorder %s16, 0
    %p121 = por %p119, %p120
    %p122 = scmp.ne.s32.totalorder %s110, %s111
    %p123 = scmp.eq.s32.totalorder %s17, 3
    %p124 = por %p122, %p123
    %p126 = scmp.ne.s32.totalorder %s111, %s125
    %p127 = scmp.eq.s32.totalorder %s17, 0
    %p128 = por %p126, %p127
    %s129 = ssub.s32 %s11, %s18
    %p130 = scmp.eq.s32.totalorder %s129, 0
    %s132 = sadd.s32 %s131, 1
    %s133 = scalar_select %p130, %s131, %s132
    %p136 = pneg %p130
    %p137 = scmp.eq.s32.totalorder %s11, 3
    %p138 = por %p136, %p137
    %p139 = scmp.ne.s32.totalorder %s131, %s134
    %p140 = scmp.eq.s32.totalorder %s11, 0
    %p141 = por %p139, %p140
    %p142 = scmp.ne.s32.totalorder %s131, %s134
    %p143 = scmp.eq.s32.totalorder %s16, 3
    %p144 = por %p142, %p143
    %p145 = scmp.ne.s32.totalorder %s134, %s135
    %p146 = scmp.eq.s32.totalorder %s16, 0
    %p147 = por %p145, %p146
    %p148 = scmp.ne.s32.totalorder %s134, %s135
    %p149 = scmp.eq.s32.totalorder %s17, 3
    %p150 = por %p148, %p149
    %p152 = scmp.ne.s32.totalorder %s135, %s151
    %p153 = scmp.eq.s32.totalorder %s17, 0
    %p154 = por %p152, %p153
    %p155 = scmp.le.s32.totalorder 1, %s11
    %p156 = scmp.lt.s32.totalorder %s11, 5
    %p157 = pnand %p155, %p156
    %p158 = pneg %p157
    // Predicated region
    $region9: #{quadratic_layer_forward.1} parent=5 // pred_check
      _
    $region10: #{quadratic_layer_forward.1} parent=5 // pred_check_branch
      %160 = sbr.rel (%p157) target = $region12
    $region11: #{quadratic_layer_forward.1} parent=5 // pred_region
      %s161 = ssub.s32 %s11, 1
      // Predicated region
      $region13: #{quadratic_layer_forward.1} parent=11 // pred_check
        %p162 = pneg %p58
      $region14: #{quadratic_layer_forward.1} parent=11 // pred_check_branch
        %164 = sbr.rel (%p162) target = $region16
      $region15: #{quadratic_layer_forward.1} parent=11 // pred_region
        _
      $region16: #{quadratic_layer_forward.1} parent=11 // pred_fallthru
        _
      // Predicated region
      $region17: #{quadratic_layer_forward.1} parent=11 // pred_check
        %p165 = pneg %p79
      $region18: #{quadratic_layer_forward.1} parent=11 // pred_check_branch
        %167 = sbr.rel (%p165) target = $region20
      $region19: #{quadratic_layer_forward.1} parent=11 // pred_region
        _
      $region20: #{quadratic_layer_forward.1} parent=11 // pred_fallthru
        _
      // Predicated region
      $region21: #{quadratic_layer_forward.1} parent=11 // pred_check
        %p168 = pneg %p100
      $region22: #{quadratic_layer_forward.1} parent=11 // pred_check_branch
        %170 = sbr.rel (%p168) target = $region24
      $region23: #{quadratic_layer_forward.1} parent=11 // pred_region
        _
      $region24: #{quadratic_layer_forward.1} parent=11 // pred_fallthru
        _
      // Predicated region
      $region25: #{quadratic_layer_forward.1} parent=11 // pred_check
        %p171 = pneg %p121
      $region26: #{quadratic_layer_forward.1} parent=11 // pred_check_branch
        %173 = sbr.rel (%p171) target = $region28
      $region27: #{quadratic_layer_forward.1} parent=11 // pred_region
        _
      $region28: #{quadratic_layer_forward.1} parent=11 // pred_fallthru
        _
    $region12: #{quadratic_layer_forward.1} parent=5 // pred_fallthru
      _
    %p174 = scmp.lt.s32.totalorder %s11, 4
    // Predicated region
    $region29: #{quadratic_layer_forward.1} parent=5 // pred_check
      %p175 = pneg %p174
    $region30: #{quadratic_layer_forward.1} parent=5 // pred_check_branch
      %177 = sbr.rel (%p175) target = $region32
    $region31: #{quadratic_layer_forward.1} parent=5 // pred_region
      // Predicated region
      $region33: #{quadratic_layer_forward.1} parent=31 // pred_check
        %p178 = pneg %p31
      $region34: #{quadratic_layer_forward.1} parent=31 // pred_check_branch
        %180 = sbr.rel (%p178) target = $region36
      $region35: #{quadratic_layer_forward.1} parent=31 // pred_region
        %s181 = smul.u32 8, %s11
        %p182 = scmp.lt.s32.totalorder %s181, 31
        %s183 = scalar_select %p182, %s181, 31
        %s184 = smul.addr %s183, 4
        %s185 = smul.addr %s184, 4
        %s186 = scalar_lea.vmem %s0, %s185
        %s187 = smul.u32 8, %s11
      $region36: #{quadratic_layer_forward.1} parent=31 // pred_fallthru
        _
    $region32: #{quadratic_layer_forward.1} parent=5 // pred_fallthru
      _
    %p188 = scmp.le.s32.totalorder 1, %s11
    %p189 = scmp.lt.s32.totalorder %s11, 5
    %p190 = pnand %p188, %p189
    %p191 = pneg %p190
    // Predicated region
    $region37: #{quadratic_layer_forward.1} parent=5 // pred_check
      _
    $region38: #{quadratic_layer_forward.1} parent=5 // pred_check_branch
      %193 = sbr.rel (%p190) target = $region40
    $region39: #{quadratic_layer_forward.1} parent=5 // pred_region
      %s194 = ssub.s32 %s11, 1
      %s195 = smul.u32 8, %s16
      %p196 = scmp.lt.s32.totalorder %s195, 31
      %s197 = scalar_select %p196, %s195, 31
      %s198 = smul.addr %s197, 4
      %s199 = smul.addr %s198, 4
      %s200 = scalar_lea.vmem %s0, %s199
      %p201 = pneg %p37
      %p202 = pneg %p34
      %p203 = pneg %p58
      %p204 = pneg %p55
      %p205 = pneg %p79
      %p206 = pneg %p76
      %p207 = pneg %p100
      %p208 = pneg %p97
      %p209 = pneg %p121
      %p210 = pneg %p118
      %p211 = pneg %p147
      %p212 = pneg %p144
      %s213 = smul.u32 8, %s16
      %p214 = scmp.lt.s32.totalorder %s213, 31
      %s215 = scalar_select %p214, %s213, 31
      %s216 = smul.addr %s215, 4
      %s217 = scalar_lea.vmem %s5, %s216
      %s218 = smul.u32 8, %s16
      %p219 = scmp.lt.s32.totalorder %s218, 31
      %s220 = scalar_select %p219, %s218, 31
      %s221 = smul.addr %s220, 4
      %s222 = smul.addr %s221, 4
      %s223 = scalar_lea.vmem %s0, %s222
      %s224 = smul.u32 8, %s16
      %s225 = smul.u32 8, %s16
      %p226 = scmp.lt.s32.totalorder %s225, 31
      %s227 = scalar_select %p226, %s225, 31
      %s228 = smul.addr %s227, 4
      %s229 = scalar_lea.vmem %s5, %s228
      %s230 = smul.u32 8, %s16
      %v232 = vld [vmem:[%s223] sm:$0xff]
      %v233 = vld [vmem:[%s223 + $0x8] sm:$0xff]
      %v234 = vld [vmem:[%s223 + $0x10] sm:$0xff]
      %v235 = vld [vmem:[%s223 + $0x18] sm:$0xff]
      %v236 = vld [vmem:[%s223 + $0x20] sm:$0xff]
      %v237 = vld [vmem:[%s223 + $0x28] sm:$0xff]
      %v238 = vld [vmem:[%s223 + $0x30] sm:$0xff]
      %v239 = vld [vmem:[%s223 + $0x38] sm:$0xff]
      %v240 = vld [vmem:[%s223 + $0x40] sm:$0xff]
      %v241 = vld [vmem:[%s223 + $0x48] sm:$0xff]
      %v242 = vld [vmem:[%s223 + $0x50] sm:$0xff]
      %v243 = vld [vmem:[%s223 + $0x58] sm:$0xff]
      %v244 = vld [vmem:[%s223 + $0x60] sm:$0xff]
      %v245 = vld [vmem:[%s223 + $0x68] sm:$0xff]
      %v246 = vld [vmem:[%s223 + $0x70] sm:$0xff]
      %v247 = vld [vmem:[%s223 + $0x78] sm:$0xff]
      %v248 = vld [vmem:[%s1] sm:$0xff]
      %v249 = vld [vmem:[%s1 + $0x8] sm:$0xff]
      %v250 = vld [vmem:[%s1 + $0x10] sm:$0xff]
      %v251 = vld [vmem:[%s1 + $0x18] sm:$0xff]
      %v252 = vld [vmem:[%s1 + $0x20] sm:$0xff]
      %v253 = vld [vmem:[%s1 + $0x28] sm:$0xff]
      %v254 = vld [vmem:[%s1 + $0x30] sm:$0xff]
      %v255 = vld [vmem:[%s1 + $0x38] sm:$0xff]
      %v256 = vld [vmem:[%s1 + $0x40] sm:$0xff]
      %v257 = vld [vmem:[%s1 + $0x48] sm:$0xff]
      %v258 = vld [vmem:[%s1 + $0x50] sm:$0xff]
      %v259 = vld [vmem:[%s1 + $0x58] sm:$0xff]
      %v260 = vld [vmem:[%s1 + $0x60] sm:$0xff]
      %v261 = vld [vmem:[%s1 + $0x68] sm:$0xff]
      %v262 = vld [vmem:[%s1 + $0x70] sm:$0xff]
      %v263 = vld [vmem:[%s1 + $0x78] sm:$0xff]
      %v264 = vld [vmem:[%s1 + $0x80] sm:$0xff]
      %v265 = vld [vmem:[%s1 + $0x88] sm:$0xff]
      %v266 = vld [vmem:[%s1 + $0x90] sm:$0xff]
      %v267 = vld [vmem:[%s1 + $0x98] sm:$0xff]
      %v268 = vld [vmem:[%s1 + $0xa0] sm:$0xff]
      %v269 = vld [vmem:[%s1 + $0xa8] sm:$0xff]
      %v270 = vld [vmem:[%s1 + $0xb0] sm:$0xff]
      %v271 = vld [vmem:[%s1 + $0xb8] sm:$0xff]
      %v272 = vld [vmem:[%s1 + $0xc0] sm:$0xff]
      %v273 = vld [vmem:[%s1 + $0xc8] sm:$0xff]
      %v274 = vld [vmem:[%s1 + $0xd0] sm:$0xff]
      %v275 = vld [vmem:[%s1 + $0xd8] sm:$0xff]
      %v276 = vld [vmem:[%s1 + $0xe0] sm:$0xff]
      %v277 = vld [vmem:[%s1 + $0xe8] sm:$0xff]
      %v278 = vld [vmem:[%s1 + $0xf0] sm:$0xff]
      %v279 = vld [vmem:[%s1 + $0xf8] sm:$0xff]
      %v280 = vld [vmem:[%s1 + $0x100] sm:$0xff]
      %v281 = vld [vmem:[%s1 + $0x108] sm:$0xff]
      %v282 = vld [vmem:[%s1 + $0x110] sm:$0xff]
      %v283 = vld [vmem:[%s1 + $0x118] sm:$0xff]
      %v284 = vld [vmem:[%s1 + $0x120] sm:$0xff]
      %v285 = vld [vmem:[%s1 + $0x128] sm:$0xff]
      %v286 = vld [vmem:[%s1 + $0x130] sm:$0xff]
      %v287 = vld [vmem:[%s1 + $0x138] sm:$0xff]
      %v288 = vld [vmem:[%s1 + $0x140] sm:$0xff]
      %v289 = vld [vmem:[%s1 + $0x148] sm:$0xff]
      %v290 = vld [vmem:[%s1 + $0x150] sm:$0xff]
      %v291 = vld [vmem:[%s1 + $0x158] sm:$0xff]
      %v292 = vld [vmem:[%s1 + $0x160] sm:$0xff]
      %v293 = vld [vmem:[%s1 + $0x168] sm:$0xff]
      %v294 = vld [vmem:[%s1 + $0x170] sm:$0xff]
      %v295 = vld [vmem:[%s1 + $0x178] sm:$0xff]
      %v296 = vld [vmem:[%s1 + $0x180] sm:$0xff]
      %v297 = vld [vmem:[%s1 + $0x188] sm:$0xff]
      %v298 = vld [vmem:[%s1 + $0x190] sm:$0xff]
      %v299 = vld [vmem:[%s1 + $0x198] sm:$0xff]
      %v300 = vld [vmem:[%s1 + $0x1a0] sm:$0xff]
      %v301 = vld [vmem:[%s1 + $0x1a8] sm:$0xff]
      %v302 = vld [vmem:[%s1 + $0x1b0] sm:$0xff]
      %v303 = vld [vmem:[%s1 + $0x1b8] sm:$0xff]
      %v304 = vld [vmem:[%s1 + $0x1c0] sm:$0xff]
      %v305 = vld [vmem:[%s1 + $0x1c8] sm:$0xff]
      %v306 = vld [vmem:[%s1 + $0x1d0] sm:$0xff]
      %v307 = vld [vmem:[%s1 + $0x1d8] sm:$0xff]
      %v308 = vld [vmem:[%s1 + $0x1e0] sm:$0xff]
      %v309 = vld [vmem:[%s1 + $0x1e8] sm:$0xff]
      %v310 = vld [vmem:[%s1 + $0x1f0] sm:$0xff]
      %v311 = vld [vmem:[%s1 + $0x1f8] sm:$0xff]
      %v328 = vunpack.c.l.b16 %v232
      %v329 = vunpack.c.h.b16 %v232
      %v330 = vunpack.c.l.b16 %v233
      %v331 = vunpack.c.h.b16 %v233
      %v332 = vunpack.c.l.b16 %v234
      %v333 = vunpack.c.h.b16 %v234
      %v334 = vunpack.c.l.b16 %v235
      %v335 = vunpack.c.h.b16 %v235
      %v336 = vunpack.c.l.b16 %v236
      %v337 = vunpack.c.h.b16 %v236
      %v338 = vunpack.c.l.b16 %v237
      %v339 = vunpack.c.h.b16 %v237
      %v340 = vunpack.c.l.b16 %v238
      %v341 = vunpack.c.h.b16 %v238
      %v342 = vunpack.c.l.b16 %v239
      %v343 = vunpack.c.h.b16 %v239
      %v344 = vunpack.c.l.b16 %v240
      %v345 = vunpack.c.h.b16 %v240
      %v346 = vunpack.c.l.b16 %v241
      %v347 = vunpack.c.h.b16 %v241
      %v348 = vunpack.c.l.b16 %v242
      %v349 = vunpack.c.h.b16 %v242
      %v350 = vunpack.c.l.b16 %v243
      %v351 = vunpack.c.h.b16 %v243
      %v352 = vunpack.c.l.b16 %v244
      %v353 = vunpack.c.h.b16 %v244
      %v354 = vunpack.c.l.b16 %v245
      %v355 = vunpack.c.h.b16 %v245
      %v356 = vunpack.c.l.b16 %v246
      %v357 = vunpack.c.h.b16 %v246
      %v358 = vunpack.c.l.b16 %v247
      %v359 = vunpack.c.h.b16 %v247
      %v360 = vpack.c.b16 %v332, %v328
      %v361 = vpack.c.b16 %v333, %v329
      %v362 = vpack.c.b16 %v334, %v330
      %v363 = vpack.c.b16 %v335, %v331
      %v364 = vpack.c.b16 %v340, %v336
      %v365 = vpack.c.b16 %v341, %v337
      %v366 = vpack.c.b16 %v342, %v338
      %v367 = vpack.c.b16 %v343, %v339
      %v368 = vpack.c.b16 %v348, %v344
      %v369 = vpack.c.b16 %v349, %v345
      %v370 = vpack.c.b16 %v350, %v346
      %v371 = vpack.c.b16 %v351, %v347
      %v372 = vpack.c.b16 %v356, %v352
      %v373 = vpack.c.b16 %v357, %v353
      %v374 = vpack.c.b16 %v358, %v354
      %v375 = vpack.c.b16 %v359, %v355
      %v456 = vunpack.c.l.b16 %v248
      %v457 = vunpack.c.h.b16 %v248
      %v458 = vunpack.c.l.b16 %v249
      %v459 = vunpack.c.h.b16 %v249
      %v460 = vunpack.c.l.b16 %v250
      %v461 = vunpack.c.h.b16 %v250
      %v462 = vunpack.c.l.b16 %v251
      %v463 = vunpack.c.h.b16 %v251
      %v464 = vunpack.c.l.b16 %v252
      %v465 = vunpack.c.h.b16 %v252
      %v466 = vunpack.c.l.b16 %v253
      %v467 = vunpack.c.h.b16 %v253
      %v468 = vunpack.c.l.b16 %v254
      %v469 = vunpack.c.h.b16 %v254
      %v470 = vunpack.c.l.b16 %v255
      %v471 = vunpack.c.h.b16 %v255
      %v472 = vunpack.c.l.b16 %v256
      %v473 = vunpack.c.h.b16 %v256
      %v474 = vunpack.c.l.b16 %v257
      %v475 = vunpack.c.h.b16 %v257
      %v476 = vunpack.c.l.b16 %v258
      %v477 = vunpack.c.h.b16 %v258
      %v478 = vunpack.c.l.b16 %v259
      %v479 = vunpack.c.h.b16 %v259
      %v480 = vunpack.c.l.b16 %v260
      %v481 = vunpack.c.h.b16 %v260
      %v482 = vunpack.c.l.b16 %v261
      %v483 = vunpack.c.h.b16 %v261
      %v484 = vunpack.c.l.b16 %v262
      %v485 = vunpack.c.h.b16 %v262
      %v486 = vunpack.c.l.b16 %v263
      %v487 = vunpack.c.h.b16 %v263
      %v488 = vunpack.c.l.b16 %v264
      %v489 = vunpack.c.h.b16 %v264
      %v490 = vunpack.c.l.b16 %v265
      %v491 = vunpack.c.h.b16 %v265
      %v492 = vunpack.c.l.b16 %v266
      %v493 = vunpack.c.h.b16 %v266
      %v494 = vunpack.c.l.b16 %v267
      %v495 = vunpack.c.h.b16 %v267
      %v496 = vunpack.c.l.b16 %v268
      %v497 = vunpack.c.h.b16 %v268
      %v498 = vunpack.c.l.b16 %v269
      %v499 = vunpack.c.h.b16 %v269
      %v500 = vunpack.c.l.b16 %v270
      %v501 = vunpack.c.h.b16 %v270
      %v502 = vunpack.c.l.b16 %v271
      %v503 = vunpack.c.h.b16 %v271
      %v504 = vunpack.c.l.b16 %v272
      %v505 = vunpack.c.h.b16 %v272
      %v506 = vunpack.c.l.b16 %v273
      %v507 = vunpack.c.h.b16 %v273
      %v508 = vunpack.c.l.b16 %v274
      %v509 = vunpack.c.h.b16 %v274
      %v510 = vunpack.c.l.b16 %v275
      %v511 = vunpack.c.h.b16 %v275
      %v512 = vunpack.c.l.b16 %v276
      %v513 = vunpack.c.h.b16 %v276
      %v514 = vunpack.c.l.b16 %v277
      %v515 = vunpack.c.h.b16 %v277
      %v516 = vunpack.c.l.b16 %v278
      %v517 = vunpack.c.h.b16 %v278
      %v518 = vunpack.c.l.b16 %v279
      %v519 = vunpack.c.h.b16 %v279
      %v520 = vunpack.c.l.b16 %v280
      %v521 = vunpack.c.h.b16 %v280
      %v522 = vunpack.c.l.b16 %v281
      %v523 = vunpack.c.h.b16 %v281
      %v524 = vunpack.c.l.b16 %v282
      %v525 = vunpack.c.h.b16 %v282
      %v526 = vunpack.c.l.b16 %v283
      %v527 = vunpack.c.h.b16 %v283
      %v528 = vunpack.c.l.b16 %v284
      %v529 = vunpack.c.h.b16 %v284
      %v530 = vunpack.c.l.b16 %v285
      %v531 = vunpack.c.h.b16 %v285
      %v532 = vunpack.c.l.b16 %v286
      %v533 = vunpack.c.h.b16 %v286
      %v534 = vunpack.c.l.b16 %v287
      %v535 = vunpack.c.h.b16 %v287
      %v536 = vunpack.c.l.b16 %v288
      %v537 = vunpack.c.h.b16 %v288
      %v538 = vunpack.c.l.b16 %v289
      %v539 = vunpack.c.h.b16 %v289
      %v540 = vunpack.c.l.b16 %v290
      %v541 = vunpack.c.h.b16 %v290
      %v542 = vunpack.c.l.b16 %v291
      %v543 = vunpack.c.h.b16 %v291
      %v544 = vunpack.c.l.b16 %v292
      %v545 = vunpack.c.h.b16 %v292
      %v546 = vunpack.c.l.b16 %v293
      %v547 = vunpack.c.h.b16 %v293
      %v548 = vunpack.c.l.b16 %v294
      %v549 = vunpack.c.h.b16 %v294
      %v550 = vunpack.c.l.b16 %v295
      %v551 = vunpack.c.h.b16 %v295
      %v552 = vunpack.c.l.b16 %v296
      %v553 = vunpack.c.h.b16 %v296
      %v554 = vunpack.c.l.b16 %v297
      %v555 = vunpack.c.h.b16 %v297
      %v556 = vunpack.c.l.b16 %v298
      %v557 = vunpack.c.h.b16 %v298
      %v558 = vunpack.c.l.b16 %v299
      %v559 = vunpack.c.h.b16 %v299
      %v560 = vunpack.c.l.b16 %v300
      %v561 = vunpack.c.h.b16 %v300
      %v562 = vunpack.c.l.b16 %v301
      %v563 = vunpack.c.h.b16 %v301
      %v564 = vunpack.c.l.b16 %v302
      %v565 = vunpack.c.h.b16 %v302
      %v566 = vunpack.c.l.b16 %v303
      %v567 = vunpack.c.h.b16 %v303
      %v568 = vunpack.c.l.b16 %v304
      %v569 = vunpack.c.h.b16 %v304
      %v570 = vunpack.c.l.b16 %v305
      %v571 = vunpack.c.h.b16 %v305
      %v572 = vunpack.c.l.b16 %v306
      %v573 = vunpack.c.h.b16 %v306
      %v574 = vunpack.c.l.b16 %v307
      %v575 = vunpack.c.h.b16 %v307
      %v576 = vunpack.c.l.b16 %v308
      %v577 = vunpack.c.h.b16 %v308
      %v578 = vunpack.c.l.b16 %v309
      %v579 = vunpack.c.h.b16 %v309
      %v580 = vunpack.c.l.b16 %v310
      %v581 = vunpack.c.h.b16 %v310
      %v582 = vunpack.c.l.b16 %v311
      %v583 = vunpack.c.h.b16 %v311
      %v584 = vpack.c.b16 %v458, %v456
      %v585 = vpack.c.b16 %v459, %v457
      %v586 = vpack.c.b16 %v462, %v460
      %v587 = vpack.c.b16 %v463, %v461
      %v588 = vpack.c.b16 %v466, %v464
      %v589 = vpack.c.b16 %v467, %v465
      %v590 = vpack.c.b16 %v470, %v468
      %v591 = vpack.c.b16 %v471, %v469
      %v592 = vpack.c.b16 %v474, %v472
      %v593 = vpack.c.b16 %v475, %v473
      %v594 = vpack.c.b16 %v478, %v476
      %v595 = vpack.c.b16 %v479, %v477
      %v596 = vpack.c.b16 %v482, %v480
      %v597 = vpack.c.b16 %v483, %v481
      %v598 = vpack.c.b16 %v486, %v484
      %v599 = vpack.c.b16 %v487, %v485
      %v600 = vpack.c.b16 %v490, %v488
      %v601 = vpack.c.b16 %v491, %v489
      %v602 = vpack.c.b16 %v494, %v492
      %v603 = vpack.c.b16 %v495, %v493
      %v604 = vpack.c.b16 %v498, %v496
      %v605 = vpack.c.b16 %v499, %v497
      %v606 = vpack.c.b16 %v502, %v500
      %v607 = vpack.c.b16 %v503, %v501
      %v608 = vpack.c.b16 %v506, %v504
      %v609 = vpack.c.b16 %v507, %v505
      %v610 = vpack.c.b16 %v510, %v508
      %v611 = vpack.c.b16 %v511, %v509
      %v612 = vpack.c.b16 %v514, %v512
      %v613 = vpack.c.b16 %v515, %v513
      %v614 = vpack.c.b16 %v518, %v516
      %v615 = vpack.c.b16 %v519, %v517
      %v616 = vpack.c.b16 %v522, %v520
      %v617 = vpack.c.b16 %v523, %v521
      %v618 = vpack.c.b16 %v526, %v524
      %v619 = vpack.c.b16 %v527, %v525
      %v620 = vpack.c.b16 %v530, %v528
      %v621 = vpack.c.b16 %v531, %v529
      %v622 = vpack.c.b16 %v534, %v532
      %v623 = vpack.c.b16 %v535, %v533
      %v624 = vpack.c.b16 %v538, %v536
      %v625 = vpack.c.b16 %v539, %v537
      %v626 = vpack.c.b16 %v542, %v540
      %v627 = vpack.c.b16 %v543, %v541
      %v628 = vpack.c.b16 %v546, %v544
      %v629 = vpack.c.b16 %v547, %v545
      %v630 = vpack.c.b16 %v550, %v548
      %v631 = vpack.c.b16 %v551, %v549
      %v632 = vpack.c.b16 %v554, %v552
      %v633 = vpack.c.b16 %v555, %v553
      %v634 = vpack.c.b16 %v558, %v556
      %v635 = vpack.c.b16 %v559, %v557
      %v636 = vpack.c.b16 %v562, %v560
      %v637 = vpack.c.b16 %v563, %v561
      %v638 = vpack.c.b16 %v566, %v564
      %v639 = vpack.c.b16 %v567, %v565
      %v640 = vpack.c.b16 %v570, %v568
      %v641 = vpack.c.b16 %v571, %v569
      %v642 = vpack.c.b16 %v574, %v572
      %v643 = vpack.c.b16 %v575, %v573
      %v644 = vpack.c.b16 %v578, %v576
      %v645 = vpack.c.b16 %v579, %v577
      %v646 = vpack.c.b16 %v582, %v580
      %v647 = vpack.c.b16 %v583, %v581
      %712 = vmatprep.subr.bf16.mxu0 %v599
      %713 = vmatpush1.bf16.msra.mxu0 %v598
      %714 = vmatprep.subr.bf16.mxu0 %v597
      %715 = vmatpush1.bf16.msra.mxu0 %v596
      %716 = vmatprep.subr.bf16.mxu0 %v595
      %717 = vmatpush1.bf16.msra.mxu0 %v594
      %718 = vmatprep.subr.bf16.mxu0 %v593
      %719 = vmatpush1.bf16.msra.mxu0 %v592
      %720 = vmatprep.subr.bf16.mxu0 %v591
      %721 = vmatpush1.bf16.msra.mxu0 %v590
      %722 = vmatprep.subr.bf16.mxu0 %v589
      %723 = vmatpush1.bf16.msra.mxu0 %v588
      %724 = vmatprep.subr.bf16.mxu0 %v587
      %725 = vmatpush1.bf16.msra.mxu0 %v586
      %726 = vmatprep.subr.bf16.mxu0 %v585
      %727 = vmatpush1.bf16.msra.mxu0 %v584
      %728 = vmatprep.subr.bf16.mxu0 %v615
      %729 = vmatpush2.bf16.msra.mxu0 %v614
      %730 = vmatprep.subr.bf16.mxu0 %v613
      %731 = vmatpush2.bf16.msra.mxu0 %v612
      %732 = vmatprep.subr.bf16.mxu0 %v611
      %733 = vmatpush2.bf16.msra.mxu0 %v610
      %734 = vmatprep.subr.bf16.mxu0 %v609
      %735 = vmatpush2.bf16.msra.mxu0 %v608
      %736 = vmatprep.subr.bf16.mxu0 %v607
      %737 = vmatpush2.bf16.msra.mxu0 %v606
      %738 = vmatprep.subr.bf16.mxu0 %v605
      %739 = vmatpush2.bf16.msra.mxu0 %v604
      %740 = vmatprep.subr.bf16.mxu0 %v603
      %741 = vmatpush2.bf16.msra.mxu0 %v602
      %742 = vmatprep.subr.bf16.mxu0 %v601
      %743 = vmatpush2.bf16.msra.mxu0 %v600
      %744 = vmatprep.mubr.bf16.mxu0 %v361
      %745 = vmatmul.mubr.bf16.gmra.mxu0 %v360
      %v746 = vpop.f32.mrf.mxu0
      %v747 = vadd.f32 0.0, %v746
      %v748 = vpop.f32.mrf.mxu0
      %v749 = vadd.f32 0.0, %v748
      %v750 = vpop.f32.mrf.mxu0
      %v751 = vadd.f32 0.0, %v750
      %v752 = vpop.f32.mrf.mxu0
      %v753 = vadd.f32 0.0, %v752
      %754 = vmatprep.mubr.bf16.mxu0 %v365
      %755 = vmatmul.mubr.bf16.gmra.mxu0 %v364
      %v756 = vpop.f32.mrf.mxu0
      %v757 = vadd.f32 0.0, %v756
      %v758 = vpop.f32.mrf.mxu0
      %v759 = vadd.f32 0.0, %v758
      %v760 = vpop.f32.mrf.mxu0
      %v761 = vadd.f32 0.0, %v760
      %v762 = vpop.f32.mrf.mxu0
      %v763 = vadd.f32 0.0, %v762
      %764 = vmatprep.mubr.bf16.mxu0 %v369
      %765 = vmatmul.mubr.bf16.gmra.mxu0 %v368
      %v766 = vpop.f32.mrf.mxu0
      %v767 = vadd.f32 0.0, %v766
      %v768 = vpop.f32.mrf.mxu0
      %v769 = vadd.f32 0.0, %v768
      %v770 = vpop.f32.mrf.mxu0
      %v771 = vadd.f32 0.0, %v770
      %v772 = vpop.f32.mrf.mxu0
      %v773 = vadd.f32 0.0, %v772
      %774 = vmatprep.mubr.bf16.mxu0 %v373
      %775 = vmatmul.mubr.bf16.gmra.mxu0 %v372
      %v776 = vpop.f32.mrf.mxu0
      %v777 = vadd.f32 0.0, %v776
      %v778 = vpop.f32.mrf.mxu0
      %v779 = vadd.f32 0.0, %v778
      %v780 = vpop.f32.mrf.mxu0
      %v781 = vadd.f32 0.0, %v780
      %v782 = vpop.f32.mrf.mxu0
      %v783 = vadd.f32 0.0, %v782
      %784 = vdwg.mxu0
      %785 = vmatprep.subr.bf16.mxu0 %v631
      %786 = vmatpush1.bf16.msra.mxu0 %v630
      %787 = vmatprep.subr.bf16.mxu0 %v629
      %788 = vmatpush1.bf16.msra.mxu0 %v628
      %789 = vmatprep.subr.bf16.mxu0 %v627
      %790 = vmatpush1.bf16.msra.mxu0 %v626
      %791 = vmatprep.subr.bf16.mxu0 %v625
      %792 = vmatpush1.bf16.msra.mxu0 %v624
      %793 = vmatprep.subr.bf16.mxu0 %v623
      %794 = vmatpush1.bf16.msra.mxu0 %v622
      %795 = vmatprep.subr.bf16.mxu0 %v621
      %796 = vmatpush1.bf16.msra.mxu0 %v620
      %797 = vmatprep.subr.bf16.mxu0 %v619
      %798 = vmatpush1.bf16.msra.mxu0 %v618
      %799 = vmatprep.subr.bf16.mxu0 %v617
      %800 = vmatpush1.bf16.msra.mxu0 %v616
      %801 = vmatprep.subr.bf16.mxu0 %v647
      %802 = vmatpush2.bf16.msra.mxu0 %v646
      %803 = vmatprep.subr.bf16.mxu0 %v645
      %804 = vmatpush2.bf16.msra.mxu0 %v644
      %805 = vmatprep.subr.bf16.mxu0 %v643
      %806 = vmatpush2.bf16.msra.mxu0 %v642
      %807 = vmatprep.subr.bf16.mxu0 %v641
      %808 = vmatpush2.bf16.msra.mxu0 %v640
      %809 = vmatprep.subr.bf16.mxu0 %v639
      %810 = vmatpush2.bf16.msra.mxu0 %v638
      %811 = vmatprep.subr.bf16.mxu0 %v637
      %812 = vmatpush2.bf16.msra.mxu0 %v636
      %813 = vmatprep.subr.bf16.mxu0 %v635
      %814 = vmatpush2.bf16.msra.mxu0 %v634
      %815 = vmatprep.subr.bf16.mxu0 %v633
      %816 = vmatpush2.bf16.msra.mxu0 %v632
      %817 = vmatprep.mubr.bf16.mxu0 %v363
      %818 = vmatmul.mubr.bf16.gmra.mxu0 %v362
      %v819 = vpop.f32.mrf.mxu0
      %v820 = vadd.f32 %v747, %v819
      %v821 = vpop.f32.mrf.mxu0
      %v822 = vadd.f32 %v749, %v821
      %v823 = vpop.f32.mrf.mxu0
      %v824 = vadd.f32 %v751, %v823
      %v825 = vpop.f32.mrf.mxu0
      %v826 = vadd.f32 %v753, %v825
      %827 = vmatprep.mubr.bf16.mxu0 %v367
      %828 = vmatmul.mubr.bf16.gmra.mxu0 %v366
      %v829 = vpop.f32.mrf.mxu0
      %v830 = vadd.f32 %v757, %v829
      %v831 = vpop.f32.mrf.mxu0
      %v832 = vadd.f32 %v759, %v831
      %v833 = vpop.f32.mrf.mxu0
      %v834 = vadd.f32 %v761, %v833
      %v835 = vpop.f32.mrf.mxu0
      %v836 = vadd.f32 %v763, %v835
      %837 = vmatprep.mubr.bf16.mxu0 %v371
      %838 = vmatmul.mubr.bf16.gmra.mxu0 %v370
      %v839 = vpop.f32.mrf.mxu0
      %v840 = vadd.f32 %v767, %v839
      %v841 = vpop.f32.mrf.mxu0
      %v842 = vadd.f32 %v769, %v841
      %v843 = vpop.f32.mrf.mxu0
      %v844 = vadd.f32 %v771, %v843
      %v845 = vpop.f32.mrf.mxu0
      %v846 = vadd.f32 %v773, %v845
      %847 = vmatprep.mubr.bf16.mxu0 %v375
      %848 = vmatmul.mubr.bf16.gmra.mxu0 %v374
      %v849 = vpop.f32.mrf.mxu0
      %v850 = vadd.f32 %v777, %v849
      %v851 = vpop.f32.mrf.mxu0
      %v852 = vadd.f32 %v779, %v851
      %v853 = vpop.f32.mrf.mxu0
      %v854 = vadd.f32 %v781, %v853
      %v855 = vpop.f32.mrf.mxu0
      %v856 = vadd.f32 %v783, %v855
      %857 = vdwg.mxu0
      %v858 = vmul.f32 %v820, %v820
      %v859 = vmul.f32 %v822, %v822
      %v860 = vmul.f32 %v824, %v824
      %v861 = vmul.f32 %v826, %v826
      %v862 = vmul.f32 %v830, %v830
      %v863 = vmul.f32 %v832, %v832
      %v864 = vmul.f32 %v834, %v834
      %v865 = vmul.f32 %v836, %v836
      %v866 = vmul.f32 %v840, %v840
      %v867 = vmul.f32 %v842, %v842
      %v868 = vmul.f32 %v844, %v844
      %v869 = vmul.f32 %v846, %v846
      %v870 = vmul.f32 %v850, %v850
      %v871 = vmul.f32 %v852, %v852
      %v872 = vmul.f32 %v854, %v854
      %v873 = vmul.f32 %v856, %v856
      %v874 = vpack.c.bf16 %v860, %v858
      %v875 = vpack.c.bf16 %v861, %v859
      %v876 = vpack.c.bf16 %v864, %v862
      %v877 = vpack.c.bf16 %v865, %v863
      %v878 = vpack.c.bf16 %v868, %v866
      %v879 = vpack.c.bf16 %v869, %v867
      %v880 = vpack.c.bf16 %v872, %v870
      %v881 = vpack.c.bf16 %v873, %v871
      %v882 = vld [vmem:[%s2] sm:$0xf]
      %v883 = vld [vmem:[%s2 + $0x4] sm:$0xf]
      %v884 = vld [vmem:[%s2 + $0x8] sm:$0xf]
      %v885 = vld [vmem:[%s2 + $0xc] sm:$0xf]
      %v886 = vld [vmem:[%s2 + $0x10] sm:$0xf]
      %v887 = vld [vmem:[%s2 + $0x14] sm:$0xf]
      %v888 = vld [vmem:[%s2 + $0x18] sm:$0xf]
      %v889 = vld [vmem:[%s2 + $0x1c] sm:$0xf]
      %v890 = vld [vmem:[%s2 + $0x20] sm:$0xf]
      %v891 = vld [vmem:[%s2 + $0x24] sm:$0xf]
      %v892 = vld [vmem:[%s2 + $0x28] sm:$0xf]
      %v893 = vld [vmem:[%s2 + $0x2c] sm:$0xf]
      %v894 = vld [vmem:[%s2 + $0x30] sm:$0xf]
      %v895 = vld [vmem:[%s2 + $0x34] sm:$0xf]
      %v896 = vld [vmem:[%s2 + $0x38] sm:$0xf]
      %v897 = vld [vmem:[%s2 + $0x3c] sm:$0xf]
      %v898 = vld [vmem:[%s2 + $0x40] sm:$0xf]
      %v899 = vld [vmem:[%s2 + $0x44] sm:$0xf]
      %v900 = vld [vmem:[%s2 + $0x48] sm:$0xf]
      %v901 = vld [vmem:[%s2 + $0x4c] sm:$0xf]
      %v902 = vld [vmem:[%s2 + $0x50] sm:$0xf]
      %v903 = vld [vmem:[%s2 + $0x54] sm:$0xf]
      %v904 = vld [vmem:[%s2 + $0x58] sm:$0xf]
      %v905 = vld [vmem:[%s2 + $0x5c] sm:$0xf]
      %v906 = vld [vmem:[%s2 + $0x60] sm:$0xf]
      %v907 = vld [vmem:[%s2 + $0x64] sm:$0xf]
      %v908 = vld [vmem:[%s2 + $0x68] sm:$0xf]
      %v909 = vld [vmem:[%s2 + $0x6c] sm:$0xf]
      %v910 = vld [vmem:[%s2 + $0x70] sm:$0xf]
      %v911 = vld [vmem:[%s2 + $0x74] sm:$0xf]
      %v912 = vld [vmem:[%s2 + $0x78] sm:$0xf]
      %v913 = vld [vmem:[%s2 + $0x7c] sm:$0xf]
      %v914 = vld [vmem:[%s3] sm:$0xf]
      %v915 = vld [vmem:[%s3 + $0x4] sm:$0xf]
      %v916 = vld [vmem:[%s3 + $0x8] sm:$0xf]
      %v917 = vld [vmem:[%s3 + $0xc] sm:$0xf]
      %v918 = vld [vmem:[%s3 + $0x10] sm:$0xf]
      %v919 = vld [vmem:[%s3 + $0x14] sm:$0xf]
      %v920 = vld [vmem:[%s3 + $0x18] sm:$0xf]
      %v921 = vld [vmem:[%s3 + $0x1c] sm:$0xf]
      %v922 = vld [vmem:[%s3 + $0x20] sm:$0xf]
      %v923 = vld [vmem:[%s3 + $0x24] sm:$0xf]
      %v924 = vld [vmem:[%s3 + $0x28] sm:$0xf]
      %v925 = vld [vmem:[%s3 + $0x2c] sm:$0xf]
      %v926 = vld [vmem:[%s3 + $0x30] sm:$0xf]
      %v927 = vld [vmem:[%s3 + $0x34] sm:$0xf]
      %v928 = vld [vmem:[%s3 + $0x38] sm:$0xf]
      %v929 = vld [vmem:[%s3 + $0x3c] sm:$0xf]
      %v930 = vld [vmem:[%s3 + $0x40] sm:$0xf]
      %v931 = vld [vmem:[%s3 + $0x44] sm:$0xf]
      %v932 = vld [vmem:[%s3 + $0x48] sm:$0xf]
      %v933 = vld [vmem:[%s3 + $0x4c] sm:$0xf]
      %v934 = vld [vmem:[%s3 + $0x50] sm:$0xf]
      %v935 = vld [vmem:[%s3 + $0x54] sm:$0xf]
      %v936 = vld [vmem:[%s3 + $0x58] sm:$0xf]
      %v937 = vld [vmem:[%s3 + $0x5c] sm:$0xf]
      %v938 = vld [vmem:[%s3 + $0x60] sm:$0xf]
      %v939 = vld [vmem:[%s3 + $0x64] sm:$0xf]
      %v940 = vld [vmem:[%s3 + $0x68] sm:$0xf]
      %v941 = vld [vmem:[%s3 + $0x6c] sm:$0xf]
      %v942 = vld [vmem:[%s3 + $0x70] sm:$0xf]
      %v943 = vld [vmem:[%s3 + $0x74] sm:$0xf]
      %v944 = vld [vmem:[%s3 + $0x78] sm:$0xf]
      %v945 = vld [vmem:[%s3 + $0x7c] sm:$0xf]
      %v946 = vld [vmem:[%s3 + $0x80] sm:$0xf]
      %v947 = vld [vmem:[%s3 + $0x84] sm:$0xf]
      %v948 = vld [vmem:[%s3 + $0x88] sm:$0xf]
      %v949 = vld [vmem:[%s3 + $0x8c] sm:$0xf]
      %v950 = vld [vmem:[%s3 + $0x90] sm:$0xf]
      %v951 = vld [vmem:[%s3 + $0x94] sm:$0xf]
      %v952 = vld [vmem:[%s3 + $0x98] sm:$0xf]
      %v953 = vld [vmem:[%s3 + $0x9c] sm:$0xf]
      %v954 = vld [vmem:[%s3 + $0xa0] sm:$0xf]
      %v955 = vld [vmem:[%s3 + $0xa4] sm:$0xf]
      %v956 = vld [vmem:[%s3 + $0xa8] sm:$0xf]
      %v957 = vld [vmem:[%s3 + $0xac] sm:$0xf]
      %v958 = vld [vmem:[%s3 + $0xb0] sm:$0xf]
      %v959 = vld [vmem:[%s3 + $0xb4] sm:$0xf]
      %v960 = vld [vmem:[%s3 + $0xb8] sm:$0xf]
      %v961 = vld [vmem:[%s3 + $0xbc] sm:$0xf]
      %v962 = vld [vmem:[%s3 + $0xc0] sm:$0xf]
      %v963 = vld [vmem:[%s3 + $0xc4] sm:$0xf]
      %v964 = vld [vmem:[%s3 + $0xc8] sm:$0xf]
      %v965 = vld [vmem:[%s3 + $0xcc] sm:$0xf]
      %v966 = vld [vmem:[%s3 + $0xd0] sm:$0xf]
      %v967 = vld [vmem:[%s3 + $0xd4] sm:$0xf]
      %v968 = vld [vmem:[%s3 + $0xd8] sm:$0xf]
      %v969 = vld [vmem:[%s3 + $0xdc] sm:$0xf]
      %v970 = vld [vmem:[%s3 + $0xe0] sm:$0xf]
      %v971 = vld [vmem:[%s3 + $0xe4] sm:$0xf]
      %v972 = vld [vmem:[%s3 + $0xe8] sm:$0xf]
      %v973 = vld [vmem:[%s3 + $0xec] sm:$0xf]
      %v974 = vld [vmem:[%s3 + $0xf0] sm:$0xf]
      %v975 = vld [vmem:[%s3 + $0xf4] sm:$0xf]
      %v976 = vld [vmem:[%s3 + $0xf8] sm:$0xf]
      %v977 = vld [vmem:[%s3 + $0xfc] sm:$0xf]
      %v1042 = vunpack.c.l.b16 %v914
      %v1043 = vunpack.c.l.b16 %v915
      %v1044 = vunpack.c.l.b16 %v916
      %v1045 = vunpack.c.l.b16 %v917
      %v1046 = vunpack.c.l.b16 %v918
      %v1047 = vunpack.c.l.b16 %v919
      %v1048 = vunpack.c.l.b16 %v920
      %v1049 = vunpack.c.l.b16 %v921
      %v1050 = vunpack.c.l.b16 %v922
      %v1051 = vunpack.c.l.b16 %v923
      %v1052 = vunpack.c.l.b16 %v924
      %v1053 = vunpack.c.l.b16 %v925
      %v1054 = vunpack.c.l.b16 %v926
      %v1055 = vunpack.c.l.b16 %v927
      %v1056 = vunpack.c.l.b16 %v928
      %v1057 = vunpack.c.l.b16 %v929
      %v1058 = vunpack.c.l.b16 %v930
      %v1059 = vunpack.c.l.b16 %v931
      %v1060 = vunpack.c.l.b16 %v932
      %v1061 = vunpack.c.l.b16 %v933
      %v1062 = vunpack.c.l.b16 %v934
      %v1063 = vunpack.c.l.b16 %v935
      %v1064 = vunpack.c.l.b16 %v936
      %v1065 = vunpack.c.l.b16 %v937
      %v1066 = vunpack.c.l.b16 %v938
      %v1067 = vunpack.c.l.b16 %v939
      %v1068 = vunpack.c.l.b16 %v940
      %v1069 = vunpack.c.l.b16 %v941
      %v1070 = vunpack.c.l.b16 %v942
      %v1071 = vunpack.c.l.b16 %v943
      %v1072 = vunpack.c.l.b16 %v944
      %v1073 = vunpack.c.l.b16 %v945
      %v1074 = vunpack.c.l.b16 %v946
      %v1075 = vunpack.c.l.b16 %v947
      %v1076 = vunpack.c.l.b16 %v948
      %v1077 = vunpack.c.l.b16 %v949
      %v1078 = vunpack.c.l.b16 %v950
      %v1079 = vunpack.c.l.b16 %v951
      %v1080 = vunpack.c.l.b16 %v952
      %v1081 = vunpack.c.l.b16 %v953
      %v1082 = vunpack.c.l.b16 %v954
      %v1083 = vunpack.c.l.b16 %v955
      %v1084 = vunpack.c.l.b16 %v956
      %v1085 = vunpack.c.l.b16 %v957
      %v1086 = vunpack.c.l.b16 %v958
      %v1087 = vunpack.c.l.b16 %v959
      %v1088 = vunpack.c.l.b16 %v960
      %v1089 = vunpack.c.l.b16 %v961
      %v1090 = vunpack.c.l.b16 %v962
      %v1091 = vunpack.c.l.b16 %v963
      %v1092 = vunpack.c.l.b16 %v964
      %v1093 = vunpack.c.l.b16 %v965
      %v1094 = vunpack.c.l.b16 %v966
      %v1095 = vunpack.c.l.b16 %v967
      %v1096 = vunpack.c.l.b16 %v968
      %v1097 = vunpack.c.l.b16 %v969
      %v1098 = vunpack.c.l.b16 %v970
      %v1099 = vunpack.c.l.b16 %v971
      %v1100 = vunpack.c.l.b16 %v972
      %v1101 = vunpack.c.l.b16 %v973
      %v1102 = vunpack.c.l.b16 %v974
      %v1103 = vunpack.c.l.b16 %v975
      %v1104 = vunpack.c.l.b16 %v976
      %v1105 = vunpack.c.l.b16 %v977
      %v1106 = vpack.c.b16 %v1043, %v1042
      %v1107 = vpack.c.b16 %v1045, %v1044
      %v1108 = vpack.c.b16 %v1047, %v1046
      %v1109 = vpack.c.b16 %v1049, %v1048
      %v1110 = vpack.c.b16 %v1051, %v1050
      %v1111 = vpack.c.b16 %v1053, %v1052
      %v1112 = vpack.c.b16 %v1055, %v1054
      %v1113 = vpack.c.b16 %v1057, %v1056
      %v1114 = vpack.c.b16 %v1059, %v1058
      %v1115 = vpack.c.b16 %v1061, %v1060
      %v1116 = vpack.c.b16 %v1063, %v1062
      %v1117 = vpack.c.b16 %v1065, %v1064
      %v1118 = vpack.c.b16 %v1067, %v1066
      %v1119 = vpack.c.b16 %v1069, %v1068
      %v1120 = vpack.c.b16 %v1071, %v1070
      %v1121 = vpack.c.b16 %v1073, %v1072
      %v1122 = vpack.c.b16 %v1075, %v1074
      %v1123 = vpack.c.b16 %v1077, %v1076
      %v1124 = vpack.c.b16 %v1079, %v1078
      %v1125 = vpack.c.b16 %v1081, %v1080
      %v1126 = vpack.c.b16 %v1083, %v1082
      %v1127 = vpack.c.b16 %v1085, %v1084
      %v1128 = vpack.c.b16 %v1087, %v1086
      %v1129 = vpack.c.b16 %v1089, %v1088
      %v1130 = vpack.c.b16 %v1091, %v1090
      %v1131 = vpack.c.b16 %v1093, %v1092
      %v1132 = vpack.c.b16 %v1095, %v1094
      %v1133 = vpack.c.b16 %v1097, %v1096
      %v1134 = vpack.c.b16 %v1099, %v1098
      %v1135 = vpack.c.b16 %v1101, %v1100
      %v1136 = vpack.c.b16 %v1103, %v1102
      %v1137 = vpack.c.b16 %v1105, %v1104
      %1170 = vmatprep.subr.bf16.mxu0 0
      %1171 = vmatpush1.bf16.msra.mxu0 %v1113
      %1172 = vmatprep.subr.bf16.mxu0 0
      %1173 = vmatpush1.bf16.msra.mxu0 %v1112
      %1174 = vmatprep.subr.bf16.mxu0 0
      %1175 = vmatpush1.bf16.msra.mxu0 %v1111
      %1176 = vmatprep.subr.bf16.mxu0 0
      %1177 = vmatpush1.bf16.msra.mxu0 %v1110
      %1178 = vmatprep.subr.bf16.mxu0 0
      %1179 = vmatpush1.bf16.msra.mxu0 %v1109
      %1180 = vmatprep.subr.bf16.mxu0 0
      %1181 = vmatpush1.bf16.msra.mxu0 %v1108
      %1182 = vmatprep.subr.bf16.mxu0 0
      %1183 = vmatpush1.bf16.msra.mxu0 %v1107
      %1184 = vmatprep.subr.bf16.mxu0 0
      %1185 = vmatpush1.bf16.msra.mxu0 %v1106
      %1186 = vmatprep.subr.bf16.mxu0 0
      %1187 = vmatpush2.bf16.msra.mxu0 %v1121
      %1188 = vmatprep.subr.bf16.mxu0 0
      %1189 = vmatpush2.bf16.msra.mxu0 %v1120
      %1190 = vmatprep.subr.bf16.mxu0 0
      %1191 = vmatpush2.bf16.msra.mxu0 %v1119
      %1192 = vmatprep.subr.bf16.mxu0 0
      %1193 = vmatpush2.bf16.msra.mxu0 %v1118
      %1194 = vmatprep.subr.bf16.mxu0 0
      %1195 = vmatpush2.bf16.msra.mxu0 %v1117
      %1196 = vmatprep.subr.bf16.mxu0 0
      %1197 = vmatpush2.bf16.msra.mxu0 %v1116
      %1198 = vmatprep.subr.bf16.mxu0 0
      %1199 = vmatpush2.bf16.msra.mxu0 %v1115
      %1200 = vmatprep.subr.bf16.mxu0 0
      %1201 = vmatpush2.bf16.msra.mxu0 %v1114
      %1202 = vmatprep.mubr.bf16.mxu0 %v361
      %1203 = vmatmul.mubr.bf16.gmra.mxu0 %v360
      %v1204 = vpop.f32.mrf.mxu0
      %v1205 = vadd.f32 0.0, %v1204
      %v1206 = vpop.f32.mrf.mxu0
      %v1207 = vpop.f32.mrf.mxu0
      %v1208 = vadd.f32 0.0, %v1207
      %v1209 = vpop.f32.mrf.mxu0
      %1210 = vmatprep.mubr.bf16.mxu0 %v365
      %1211 = vmatmul.mubr.bf16.gmra.mxu0 %v364
      %v1212 = vpop.f32.mrf.mxu0
      %v1213 = vadd.f32 0.0, %v1212
      %v1214 = vpop.f32.mrf.mxu0
      %v1215 = vpop.f32.mrf.mxu0
      %v1216 = vadd.f32 0.0, %v1215
      %v1217 = vpop.f32.mrf.mxu0
      %1218 = vmatprep.mubr.bf16.mxu0 %v369
      %1219 = vmatmul.mubr.bf16.gmra.mxu0 %v368
      %v1220 = vpop.f32.mrf.mxu0
      %v1221 = vadd.f32 0.0, %v1220
      %v1222 = vpop.f32.mrf.mxu0
      %v1223 = vpop.f32.mrf.mxu0
      %v1224 = vadd.f32 0.0, %v1223
      %v1225 = vpop.f32.mrf.mxu0
      %1226 = vmatprep.mubr.bf16.mxu0 %v373
      %1227 = vmatmul.mubr.bf16.gmra.mxu0 %v372
      %v1228 = vpop.f32.mrf.mxu0
      %v1229 = vadd.f32 0.0, %v1228
      %v1230 = vpop.f32.mrf.mxu0
      %v1231 = vpop.f32.mrf.mxu0
      %v1232 = vadd.f32 0.0, %v1231
      %v1233 = vpop.f32.mrf.mxu0
      %1234 = vdwg.mxu0
      %1235 = vmatprep.subr.bf16.mxu0 0
      %1236 = vmatpush1.bf16.msra.mxu0 %v1129
      %1237 = vmatprep.subr.bf16.mxu0 0
      %1238 = vmatpush1.bf16.msra.mxu0 %v1128
      %1239 = vmatprep.subr.bf16.mxu0 0
      %1240 = vmatpush1.bf16.msra.mxu0 %v1127
      %1241 = vmatprep.subr.bf16.mxu0 0
      %1242 = vmatpush1.bf16.msra.mxu0 %v1126
      %1243 = vmatprep.subr.bf16.mxu0 0
      %1244 = vmatpush1.bf16.msra.mxu0 %v1125
      %1245 = vmatprep.subr.bf16.mxu0 0
      %1246 = vmatpush1.bf16.msra.mxu0 %v1124
      %1247 = vmatprep.subr.bf16.mxu0 0
      %1248 = vmatpush1.bf16.msra.mxu0 %v1123
      %1249 = vmatprep.subr.bf16.mxu0 0
      %1250 = vmatpush1.bf16.msra.mxu0 %v1122
      %1251 = vmatprep.subr.bf16.mxu0 0
      %1252 = vmatpush2.bf16.msra.mxu0 %v1137
      %1253 = vmatprep.subr.bf16.mxu0 0
      %1254 = vmatpush2.bf16.msra.mxu0 %v1136
      %1255 = vmatprep.subr.bf16.mxu0 0
      %1256 = vmatpush2.bf16.msra.mxu0 %v1135
      %1257 = vmatprep.subr.bf16.mxu0 0
      %1258 = vmatpush2.bf16.msra.mxu0 %v1134
      %1259 = vmatprep.subr.bf16.mxu0 0
      %1260 = vmatpush2.bf16.msra.mxu0 %v1133
      %1261 = vmatprep.subr.bf16.mxu0 0
      %1262 = vmatpush2.bf16.msra.mxu0 %v1132
      %1263 = vmatprep.subr.bf16.mxu0 0
      %1264 = vmatpush2.bf16.msra.mxu0 %v1131
      %1265 = vmatprep.subr.bf16.mxu0 0
      %1266 = vmatpush2.bf16.msra.mxu0 %v1130
      %1267 = vmatprep.mubr.bf16.mxu0 %v363
      %1268 = vmatmul.mubr.bf16.gmra.mxu0 %v362
      %v1269 = vpop.f32.mrf.mxu0
      %v1270 = vadd.f32 %v1205, %v1269
      %v1271 = vpop.f32.mrf.mxu0
      %v1272 = vpop.f32.mrf.mxu0
      %v1273 = vadd.f32 %v1208, %v1272
      %v1274 = vpop.f32.mrf.mxu0
      %1275 = vmatprep.mubr.bf16.mxu0 %v367
      %1276 = vmatmul.mubr.bf16.gmra.mxu0 %v366
      %v1277 = vpop.f32.mrf.mxu0
      %v1278 = vadd.f32 %v1213, %v1277
      %v1279 = vpop.f32.mrf.mxu0
      %v1280 = vpop.f32.mrf.mxu0
      %v1281 = vadd.f32 %v1216, %v1280
      %v1282 = vpop.f32.mrf.mxu0
      %1283 = vmatprep.mubr.bf16.mxu0 %v371
      %1284 = vmatmul.mubr.bf16.gmra.mxu0 %v370
      %v1285 = vpop.f32.mrf.mxu0
      %v1286 = vadd.f32 %v1221, %v1285
      %v1287 = vpop.f32.mrf.mxu0
      %v1288 = vpop.f32.mrf.mxu0
      %v1289 = vadd.f32 %v1224, %v1288
      %v1290 = vpop.f32.mrf.mxu0
      %1291 = vmatprep.mubr.bf16.mxu0 %v375
      %1292 = vmatmul.mubr.bf16.gmra.mxu0 %v374
      %v1293 = vpop.f32.mrf.mxu0
      %v1294 = vadd.f32 %v1229, %v1293
      %v1295 = vpop.f32.mrf.mxu0
      %v1296 = vpop.f32.mrf.mxu0
      %v1297 = vadd.f32 %v1232, %v1296
      %v1298 = vpop.f32.mrf.mxu0
      %1299 = vdwg.mxu0
      %v1332 = vunpack.c.l.b16 %v882
      %v1333 = vunpack.c.l.b16 %v883
      %v1334 = vunpack.c.l.b16 %v884
      %v1335 = vunpack.c.l.b16 %v885
      %v1336 = vunpack.c.l.b16 %v886
      %v1337 = vunpack.c.l.b16 %v887
      %v1338 = vunpack.c.l.b16 %v888
      %v1339 = vunpack.c.l.b16 %v889
      %v1340 = vunpack.c.l.b16 %v890
      %v1341 = vunpack.c.l.b16 %v891
      %v1342 = vunpack.c.l.b16 %v892
      %v1343 = vunpack.c.l.b16 %v893
      %v1344 = vunpack.c.l.b16 %v894
      %v1345 = vunpack.c.l.b16 %v895
      %v1346 = vunpack.c.l.b16 %v896
      %v1347 = vunpack.c.l.b16 %v897
      %v1348 = vunpack.c.l.b16 %v898
      %v1349 = vunpack.c.l.b16 %v899
      %v1350 = vunpack.c.l.b16 %v900
      %v1351 = vunpack.c.l.b16 %v901
      %v1352 = vunpack.c.l.b16 %v902
      %v1353 = vunpack.c.l.b16 %v903
      %v1354 = vunpack.c.l.b16 %v904
      %v1355 = vunpack.c.l.b16 %v905
      %v1356 = vunpack.c.l.b16 %v906
      %v1357 = vunpack.c.l.b16 %v907
      %v1358 = vunpack.c.l.b16 %v908
      %v1359 = vunpack.c.l.b16 %v909
      %v1360 = vunpack.c.l.b16 %v910
      %v1361 = vunpack.c.l.b16 %v911
      %v1362 = vunpack.c.l.b16 %v912
      %v1363 = vunpack.c.l.b16 %v913
      %v1364 = vpack.c.b16 %v1333, %v1332
      %v1365 = vpack.c.b16 %v1335, %v1334
      %v1366 = vpack.c.b16 %v1337, %v1336
      %v1367 = vpack.c.b16 %v1339, %v1338
      %v1368 = vpack.c.b16 %v1341, %v1340
      %v1369 = vpack.c.b16 %v1343, %v1342
      %v1370 = vpack.c.b16 %v1345, %v1344
      %v1371 = vpack.c.b16 %v1347, %v1346
      %v1372 = vpack.c.b16 %v1349, %v1348
      %v1373 = vpack.c.b16 %v1351, %v1350
      %v1374 = vpack.c.b16 %v1353, %v1352
      %v1375 = vpack.c.b16 %v1355, %v1354
      %v1376 = vpack.c.b16 %v1357, %v1356
      %v1377 = vpack.c.b16 %v1359, %v1358
      %v1378 = vpack.c.b16 %v1361, %v1360
      %v1379 = vpack.c.b16 %v1363, %v1362
      %1396 = vmatprep.subr.bf16.mxu0 0
      %1397 = vmatpush1.bf16.msra.mxu0 %v1371
      %1398 = vmatprep.subr.bf16.mxu0 0
      %1399 = vmatpush1.bf16.msra.mxu0 %v1370
      %1400 = vmatprep.subr.bf16.mxu0 0
      %1401 = vmatpush1.bf16.msra.mxu0 %v1369
      %1402 = vmatprep.subr.bf16.mxu0 0
      %1403 = vmatpush1.bf16.msra.mxu0 %v1368
      %1404 = vmatprep.subr.bf16.mxu0 0
      %1405 = vmatpush1.bf16.msra.mxu0 %v1367
      %1406 = vmatprep.subr.bf16.mxu0 0
      %1407 = vmatpush1.bf16.msra.mxu0 %v1366
      %1408 = vmatprep.subr.bf16.mxu0 0
      %1409 = vmatpush1.bf16.msra.mxu0 %v1365
      %1410 = vmatprep.subr.bf16.mxu0 0
      %1411 = vmatpush1.bf16.msra.mxu0 %v1364
      %1412 = vmatprep.subr.bf16.mxu0 0
      %1413 = vmatpush2.bf16.msra.mxu0 %v1379
      %1414 = vmatprep.subr.bf16.mxu0 0
      %1415 = vmatpush2.bf16.msra.mxu0 %v1378
      %1416 = vmatprep.subr.bf16.mxu0 0
      %1417 = vmatpush2.bf16.msra.mxu0 %v1377
      %1418 = vmatprep.subr.bf16.mxu0 0
      %1419 = vmatpush2.bf16.msra.mxu0 %v1376
      %1420 = vmatprep.subr.bf16.mxu0 0
      %1421 = vmatpush2.bf16.msra.mxu0 %v1375
      %1422 = vmatprep.subr.bf16.mxu0 0
      %1423 = vmatpush2.bf16.msra.mxu0 %v1374
      %1424 = vmatprep.subr.bf16.mxu0 0
      %1425 = vmatpush2.bf16.msra.mxu0 %v1373
      %1426 = vmatprep.subr.bf16.mxu0 0
      %1427 = vmatpush2.bf16.msra.mxu0 %v1372
      %1428 = vmatprep.mubr.bf16.mxu0 %v875
      %1429 = vmatmul.mubr.bf16.gmra.mxu0 %v874
      %v1430 = vpop.f32.mrf.mxu0
      %v1431 = vadd.f32 %v1270, %v1430
      %v1432 = vpop.f32.mrf.mxu0
      %v1433 = vpop.f32.mrf.mxu0
      %v1434 = vadd.f32 %v1273, %v1433
      %v1435 = vpop.f32.mrf.mxu0
      %1436 = vmatprep.mubr.bf16.mxu0 %v877
      %1437 = vmatmul.mubr.bf16.gmra.mxu0 %v876
      %v1438 = vpop.f32.mrf.mxu0
      %v1439 = vadd.f32 %v1278, %v1438
      %v1440 = vpop.f32.mrf.mxu0
      %v1441 = vpop.f32.mrf.mxu0
      %v1442 = vadd.f32 %v1281, %v1441
      %v1443 = vpop.f32.mrf.mxu0
      %1444 = vmatprep.mubr.bf16.mxu0 %v879
      %1445 = vmatmul.mubr.bf16.gmra.mxu0 %v878
      %v1446 = vpop.f32.mrf.mxu0
      %v1447 = vadd.f32 %v1286, %v1446
      %v1448 = vpop.f32.mrf.mxu0
      %v1449 = vpop.f32.mrf.mxu0
      %v1450 = vadd.f32 %v1289, %v1449
      %v1451 = vpop.f32.mrf.mxu0
      %1452 = vmatprep.mubr.bf16.mxu0 %v881
      %1453 = vmatmul.mubr.bf16.gmra.mxu0 %v880
      %v1454 = vpop.f32.mrf.mxu0
      %v1455 = vadd.f32 %v1294, %v1454
      %v1456 = vpop.f32.mrf.mxu0
      %v1457 = vpop.f32.mrf.mxu0
      %v1458 = vadd.f32 %v1297, %v1457
      %v1459 = vpop.f32.mrf.mxu0
      %1460 = vdwg.mxu0
      %v1461 = vld [vmem:[%s4] sm:$0x1]
      %v1463 = vlaneseq
      %v1464 = vshrl.u32 %v1463, 7
      %v1465 = vsub.s32 0, %v1464
      %v1466 = vrot.slane %v1461, %v1465
      %v1468 = vadd.f32 %v1431, %v1466
      %v1469 = vadd.f32 %v1434, %v1466
      %v1470 = vadd.f32 %v1439, %v1466
      %v1471 = vadd.f32 %v1442, %v1466
      %v1472 = vadd.f32 %v1447, %v1466
      %v1473 = vadd.f32 %v1450, %v1466
      %v1474 = vadd.f32 %v1455, %v1466
      %v1475 = vadd.f32 %v1458, %v1466
      %v1476 = vpack.c.bf16 %v1469, %v1468
      %v1477 = vpack.c.bf16 %v1471, %v1470
      %v1478 = vpack.c.bf16 %v1473, %v1472
      %v1479 = vpack.c.bf16 %v1475, %v1474
      %v1484 = vunpack.c.l.b16 %v1476
      %v1485 = vunpack.c.h.b16 %v1476
      %v1486 = vunpack.c.l.b16 %v1477
      %v1487 = vunpack.c.h.b16 %v1477
      %v1488 = vunpack.c.l.b16 %v1478
      %v1489 = vunpack.c.h.b16 %v1478
      %v1490 = vunpack.c.l.b16 %v1479
      %v1491 = vunpack.c.h.b16 %v1479
      %v1492 = vpack.c.b16 %v1484, %v1484
      %v1493 = vpack.c.b16 %v1485, %v1485
      %v1494 = vpack.c.b16 %v1486, %v1486
      %v1495 = vpack.c.b16 %v1487, %v1487
      %v1496 = vpack.c.b16 %v1488, %v1488
      %v1497 = vpack.c.b16 %v1489, %v1489
      %v1498 = vpack.c.b16 %v1490, %v1490
      %v1499 = vpack.c.b16 %v1491, %v1491
      %1508 = vst [vmem:[%s229] sm:$0xf] %v1492
      %1509 = vst [vmem:[%s229 + $0x4] sm:$0xf] %v1493
      %1510 = vst [vmem:[%s229 + $0x8] sm:$0xf] %v1494
      %1511 = vst [vmem:[%s229 + $0xc] sm:$0xf] %v1495
      %1512 = vst [vmem:[%s229 + $0x10] sm:$0xf] %v1496
      %1513 = vst [vmem:[%s229 + $0x14] sm:$0xf] %v1497
      %1514 = vst [vmem:[%s229 + $0x18] sm:$0xf] %v1498
      %1515 = vst [vmem:[%s229 + $0x1c] sm:$0xf] %v1499
      %s1516 = smul.u32 8, %s16
      %p1517 = scmp.lt.s32.totalorder %s1516, 31
      %s1518 = scalar_select %p1517, %s1516, 31
      %s1519 = smul.addr %s1518, 4
      %s1520 = scalar_lea.vmem %s5, %s1519
      // Predicated region
      $region41: #{quadratic_layer_forward.1} parent=39 // pred_check
        %p1521 = pneg %p144
      $region42: #{quadratic_layer_forward.1} parent=39 // pred_check_branch
        %1523 = sbr.rel (%p1521) target = $region44
      $region43: #{quadratic_layer_forward.1} parent=39 // pred_region
        %s1524 = smul.u32 8, %s16
      $region44: #{quadratic_layer_forward.1} parent=39 // pred_fallthru
        _
    $region40: #{quadratic_layer_forward.1} parent=5 // pred_fallthru
      _
    %p1525 = scmp.le.s32.totalorder 2, %s11
    // Predicated region
    $region45: #{quadratic_layer_forward.1} parent=5 // pred_check
      %p1526 = pneg %p1525
    $region46: #{quadratic_layer_forward.1} parent=5 // pred_check_branch
      %1528 = sbr.rel (%p1526) target = $region48
    $region47: #{quadratic_layer_forward.1} parent=5 // pred_region
      %s1529 = ssub.s32 %s11, 2
      // Predicated region
      $region49: #{quadratic_layer_forward.1} parent=47 // pred_check
        %p1530 = pneg %p150
      $region50: #{quadratic_layer_forward.1} parent=47 // pred_check_branch
        %1532 = sbr.rel (%p1530) target = $region52
      $region51: #{quadratic_layer_forward.1} parent=47 // pred_region
        %s1533 = smul.u32 8, %s17
        %p1534 = scmp.lt.s32.totalorder %s1533, 31
        %s1535 = scalar_select %p1534, %s1533, 31
        %s1536 = smul.addr %s1535, 4
        %s1537 = scalar_lea.vmem %s5, %s1536
      $region52: #{quadratic_layer_forward.1} parent=47 // pred_fallthru
        _
    $region48: #{quadratic_layer_forward.1} parent=5 // pred_fallthru
      _
  $region6: #{quadratic_layer_forward.1} parent=0 // loop_footer
    %s15 = sadd.s32 1, %s11
  $region7: #{quadratic_layer_forward.1} parent=0 // loop_footer_branch
    %10 = sbr.rel target = $region3
  $region8: #{quadratic_layer_forward.1} parent=0 // loop_exit
    _

</llo_original>
